<compile_context>
chip_gen: v5e
topology: v5e:2x2
jax: 0.10.0
libtpu: 0.0.40
codegen_flags: <defaults>
</compile_context>

<pallas_src>
import functools

import jax
import jax.numpy as jnp
from jax.experimental import pallas as pl
from jax.experimental.pallas import tpu as pltpu


def _round_up(a, b):
    return ((a + b - 1) // b) * b


def _cdiv(a, b):
    return -(-a // b)


_LANE = 128   # TPU lane width; tiles are multiples of this
_HALO = 128   # left-context groups carried per tile (must cover M-1)


def _polyphase_kernel(x_ref, halo_ref, w_ref, b_ref, o_ref, xs_ref, *, M, C_in, TT):
    """One (batch, time-tile) grid cell.

    x_ref:    (C_in, TT)           input groups [g0, g0+TT)
    halo_ref: (C_in, _HALO)        input groups [g0-_HALO, g0)  (left context)
    w_ref:    (s*C_out, M*C_in)    fused polyphase weights (resident)
    b_ref:    (s*C_out, 1)         bias per (phase, c_out) row (resident)
    o_ref:    (s*C_out, TT)        rows = (phase, c_out), lanes = output group
    xs_ref:   (M*C_in, TT)         VMEM scratch: stacked shifted input views
    """
    # Assemble the M shifted views so one deep matmul feeds the MXU
    # (keeps the contraction at M*C_in instead of M shallow C_in matmuls).
    xs_ref[0:C_in, :] = x_ref[...]
    for m in range(1, M):
        r0 = m * C_in
        xs_ref[r0:r0 + C_in, 0:m] = halo_ref[:, _HALO - m:]
        xs_ref[r0:r0 + C_in, m:TT] = x_ref[:, 0:TT - m]
    acc = jnp.dot(w_ref[...], xs_ref[...], preferred_element_type=jnp.float32)
    o_ref[...] = (acc + b_ref[...]).astype(o_ref.dtype)


def causal_conv_transpose1d(x_ncw, weight, bias, stride, *, max_tile_groups=4096):
    """x_ncw: (B, C_in, T_in); weight: (C_in, C_out, K) (PyTorch layout); bias: (C_out,) or None."""
    B, C_in, T_in = x_ncw.shape
    wc_in, C_out, K = weight.shape
    assert wc_in == C_in, (wc_in, C_in)
    s = int(stride)
    T_out = (T_in - 1) * s + K - s
    if T_out <= 0:
        raise ValueError("CausalConvTranspose1d needs (T_in-1)*stride + K > stride")
    M = _cdiv(K, s)                    # taps per output phase (=2 when K = 2*stride)
    assert M - 1 <= _HALO, "kernel_size/stride ratio too large for the halo"

    dtype = x_ncw.dtype
    itemsize = jnp.dtype(dtype).itemsize
    NG = _cdiv(T_out, s)               # output groups actually needed

    # ---- time-tile selection (big DMAs, bounded VMEM, minimal padding) ------
    bpg = (2 * (C_in + s * C_out) * itemsize   # double-buffered in/out blocks
           + M * C_in * itemsize               # xs scratch
           + s * C_out * 4                     # f32 accumulator value
           + s * C_out * itemsize)             # cast result before store
    fixed = (2 * C_in * _HALO * itemsize                     # halo block buffers
             + 2 * (s * C_out) * (M * C_in) * itemsize       # resident weights
             + 2 * (s * C_out) * itemsize                    # resident bias
             + (2 << 20))                                    # slack
    vmem_target = 36 << 20                                   # fits v7x 64 MiB w/ headroom
    tt_cap = max(_LANE, ((vmem_target - fixed) // bpg) // _LANE * _LANE)
    tt_cap = min(tt_cap, _round_up(max_tile_groups, _LANE))
    # Keep both v7x TensorCores busy for single-batch (vocoder) inference.
    min_tiles = 2 if (B == 1 and NG >= 2 * _LANE) else 1
    n_target = max(min_tiles, _cdiv(NG, tt_cap))
    TT = max(_LANE, min(tt_cap, _round_up(_cdiv(NG, n_target), _LANE)))
    n_tiles = _cdiv(NG, TT)
    NG_pad = n_tiles * TT

    # ---- input (pad with zeros only where correctness requires it) ----------
    # Output group g uses x[g-m], m in [0, M).  For K <= 2*s every valid group
    # (< NG <= T_in) only touches in-bounds x, so ragged edge blocks may read
    # unspecified data: it can only land in output groups >= T_in >= NG, which
    # are masked/sliced off below.  For K > 2*s the last valid groups reach
    # past T_in and must see real zeros.
    if K > 2 * s:
        T_main = NG_pad
    else:
        T_main = max(T_in, TT)         # keep block extent <= array on time axis
    if T_main > T_in:
        x_main = jnp.pad(x_ncw, ((0, 0), (0, 0), (0, T_main - T_in)))
    else:
        x_main = x_ncw

    # Per-tile halo (tiny: n_tiles * 128 groups): halo[b, t, ci, q] = x[b, ci, t*TT - _HALO + q]
    xh = jnp.pad(x_ncw, ((0, 0), (0, 0), (_HALO, max(0, NG_pad - _HALO - T_in))))
    xh = xh[:, :, :NG_pad]
    halo = (xh.reshape(B, C_in, n_tiles, TT)[:, :, :, :_HALO]
              .transpose(0, 2, 1, 3))                         # (B, n_tiles, C_in, _HALO)

    # ---- fused polyphase weights / bias --------------------------------------
    # Wt[p*C_out+co, m*C_in+ci] = W[ci, co, m*s+p]   (zero for taps m*s+p >= K)
    w_pad = jnp.pad(weight, ((0, 0), (0, 0), (0, M * s - K)))
    wt = (w_pad.reshape(C_in, C_out, M, s)
               .transpose(3, 1, 2, 0)
               .reshape(s * C_out, M * C_in)).astype(dtype)
    if bias is None:
        bias = jnp.zeros((C_out,), jnp.float32)
    b_col = jnp.tile(bias.astype(jnp.float32), s).reshape(s * C_out, 1)

    # VMEM limit derived from the actual tile (no hard 32 MiB clamp).
    vmem_limit = int(min(max(bpg * TT + fixed + (8 << 20), 32 << 20), 100 << 20))

    kernel = functools.partial(_polyphase_kernel, M=M, C_in=C_in, TT=TT)
    out = pl.pallas_call(
        kernel,
        out_shape=jax.ShapeDtypeStruct((B, s * C_out, NG_pad), dtype),
        grid=(B, n_tiles),
        in_specs=[
            pl.BlockSpec((None, C_in, TT), lambda b, j: (b, 0, j)),          # main input tile
            pl.BlockSpec((None, None, C_in, _HALO), lambda b, j: (b, j, 0, 0)),  # left halo
            pl.BlockSpec((s * C_out, M * C_in), lambda b, j: (0, 0)),        # weights (resident)
            pl.BlockSpec((s * C_out, 1), lambda b, j: (0, 0)),               # bias (resident)
        ],
        out_specs=pl.BlockSpec((None, s * C_out, TT), lambda b, j: (b, 0, j)),
        scratch_shapes=[pltpu.VMEM((M * C_in, TT), dtype)],
        compiler_params=pltpu.CompilerParams(
            dimension_semantics=("parallel", "parallel"),
            vmem_limit_bytes=vmem_limit),
    )(x_main, halo, wt, b_col)

    # ---- epilogue: interleave phases back into the time axis ----------------
    # out[b, p*C_out+co, g] -> y[b, co, g*s+p]
    # TODO(synk): fold this into the kernel (lane interleave on the idle XLU)
    # to remove the remaining output-sized read+write pass.
    y = (out.reshape(B, s, C_out, NG_pad)
            .transpose(0, 2, 3, 1)
            .reshape(B, C_out, NG_pad * s))[:, :, :T_out]
    return y


def _reference(x_ncw, weight, bias, stride):
    """Pure-JAX reference matching torch.nn.ConvTranspose1d(...)[..., :-stride]."""
    B, C_in, T_in = x_ncw.shape
    _, C_out, K = weight.shape
    s = stride
    T_full = (T_in - 1) * s + K
    contrib = jnp.einsum("bci,cok->boik", x_ncw, weight)      # (B, C_out, T_in, K)
    idx = (jnp.arange(T_in)[:, None] * s + jnp.arange(K)[None, :]).reshape(-1)
    y = jnp.zeros((B, C_out, T_full), contrib.dtype).at[:, :, idx].add(
        contrib.reshape(B, C_out, T_in * K))
    y = y + bias[None, :, None]
    return y[:, :, :-s]


if __name__ == "__main__":
    configs = [
        dict(B=2, C_in=8, C_out=4, T_in=16, K=8, stride=4),   # PWG-style K = 2*stride (M=2)
        dict(B=1, C_in=4, C_out=8, T_in=10, K=6, stride=2),   # K > 2*stride path (M=3)
    ]
    for cfg in configs:
        key = jax.random.PRNGKey(0)
        kx, kw, kb = jax.random.split(key, 3)
        x = jax.random.normal(kx, (cfg["B"], cfg["C_in"], cfg["T_in"]), jnp.float32)
        w = jax.random.normal(kw, (cfg["C_in"], cfg["C_out"], cfg["K"]), jnp.float32) * 0.1
        b = jax.random.normal(kb, (cfg["C_out"],), jnp.float32) * 0.1
        stride = cfg["stride"]

        run = jax.jit(functools.partial(causal_conv_transpose1d, stride=stride))
        out = jax.block_until_ready(run(x, w, b))

        ref = _reference(x, w, b, stride)
        T_out = (cfg["T_in"] - 1) * stride + cfg["K"] - stride
        assert out.shape == (cfg["B"], cfg["C_out"], T_out), out.shape
        max_err = float(jnp.max(jnp.abs(out - ref)))
        assert jnp.allclose(out, ref, atol=1e-3, rtol=1e-3), (cfg, max_err)
    print("KERNEL_OK")
</pallas_src>

<mosaic_0001>
module attributes {stable_mosaic.version = 11 : i64} {
  func.func @_polyphase_kernel(%arg0: i32, %arg1: i32, %arg2: memref<1x8x128xf32, #tpu.memory_space<vmem>>, %arg3: memref<1x1x8x128xf32, #tpu.memory_space<vmem>>, %arg4: memref<16x16xf32, #tpu.memory_space<vmem>>, %arg5: memref<16x1xf32, #tpu.memory_space<vmem>>, %arg6: memref<1x16x128xf32, #tpu.memory_space<vmem>>, %arg7: memref<16x128xf32, #tpu.memory_space<vmem>>) attributes {dimension_semantics = [#tpu.dimension_semantics<parallel>, #tpu.dimension_semantics<parallel>], iteration_bounds = array<i64: 2, 1>, scalar_prefetch = 0 : i64, scratch_operands = 1 : i64, tpu.core_type = #tpu.core_type<tc>, window_params = [{transform_indices = @transform_0, window_bounds = array<i64: 1, 8, 128>}, {transform_indices = @transform_1, window_bounds = array<i64: 1, 1, 8, 128>}, {pipeline_mode = #tpu.pipeline_mode<synchronous>, transform_indices = @transform_2, window_bounds = array<i64: 16, 16>}, {pipeline_mode = #tpu.pipeline_mode<synchronous>, transform_indices = @transform_3, window_bounds = array<i64: 16, 1>}, {transform_indices = @transform_4, window_bounds = array<i64: 1, 16, 128>}]} {
    %c0 = arith.constant 0 : index
    %c0_0 = arith.constant 0 : index
    %c0_1 = arith.constant 0 : index
    %0 = vector.load %arg2[%c0, %c0_0, %c0_1] : memref<1x8x128xf32, #tpu.memory_space<vmem>>, vector<1x8x128xf32>
    %1 = vector.shape_cast %0 : vector<1x8x128xf32> to vector<8x128xf32>
    %c0_2 = arith.constant 0 : index
    %c0_3 = arith.constant 0 : index
    %2 = vector.load %arg7[%c0_2, %c0_3] : memref<16x128xf32, #tpu.memory_space<vmem>>, vector<8x128xf32>
    tpu.vector_store %arg7[%c0_2, %c0_3], %1 {strides = array<i32>} : memref<16x128xf32, #tpu.memory_space<vmem>>, vector<8x128xf32>,
    %c0_4 = arith.constant 0 : index
    %c0_5 = arith.constant 0 : index
    %c0_6 = arith.constant 0 : index
    %c127 = arith.constant 127 : index
    %3 = vector.load %arg3[%c0_4, %c0_5, %c0_6, %c127] : memref<1x1x8x128xf32, #tpu.memory_space<vmem>>, vector<1x1x8x1xf32>
    %4 = vector.shape_cast %3 : vector<1x1x8x1xf32> to vector<8x1xf32>
    %c8 = arith.constant 8 : index
    %c0_7 = arith.constant 0 : index
    %5 = vector.load %arg7[%c8, %c0_7] : memref<16x128xf32, #tpu.memory_space<vmem>>, vector<8x1xf32>
    tpu.vector_store %arg7[%c8, %c0_7], %4 {strides = array<i32>} : memref<16x128xf32, #tpu.memory_space<vmem>>, vector<8x1xf32>,
    %c0_8 = arith.constant 0 : index
    %c0_9 = arith.constant 0 : index
    %c0_10 = arith.constant 0 : index
    %6 = vector.load %arg2[%c0_8, %c0_9, %c0_10] : memref<1x8x128xf32, #tpu.memory_space<vmem>>, vector<1x8x127xf32>
    %7 = vector.shape_cast %6 : vector<1x8x127xf32> to vector<8x127xf32>
    %c8_11 = arith.constant 8 : index
    %c1 = arith.constant 1 : index
    %8 = vector.load %arg7[%c8_11, %c1] : memref<16x128xf32, #tpu.memory_space<vmem>>, vector<8x127xf32>
    tpu.vector_store %arg7[%c8_11, %c1], %7 {strides = array<i32>} : memref<16x128xf32, #tpu.memory_space<vmem>>, vector<8x127xf32>,
    %c0_12 = arith.constant 0 : index
    %c0_13 = arith.constant 0 : index
    %9 = vector.load %arg4[%c0_12, %c0_13] : memref<16x16xf32, #tpu.memory_space<vmem>>, vector<16x16xf32>
    %c0_14 = arith.constant 0 : index
    %c0_15 = arith.constant 0 : index
    %10 = vector.load %arg7[%c0_14, %c0_15] : memref<16x128xf32, #tpu.memory_space<vmem>>, vector<16x128xf32>
    %cst = arith.constant dense<0.000000e+00> : vector<16x128xf32>
    %11 = tpu.matmul %9, %10, %cst {dimension_numbers = #tpu.dot_dimension_numbers<[1], [0], [0], [1], [0, 0, 1, 1], [], []>} : vector<16x16xf32>, vector<16x128xf32>, vector<16x128xf32> -> vector<16x128xf32>
    %c0_16 = arith.constant 0 : index
    %c0_17 = arith.constant 0 : index
    %12 = vector.load %arg5[%c0_16, %c0_17] : memref<16x1xf32, #tpu.memory_space<vmem>>, vector<16x1xf32>
    %13 = vector.broadcast %12 : vector<16x1xf32> to vector<16x128xf32>
    %14 = arith.addf %11, %13 : vector<16x128xf32>
    %c0_18 = arith.constant 0 : index
    %c0_19 = arith.constant 0 : index
    %c0_20 = arith.constant 0 : index
    %15 = vector.load %arg6[%c0_18, %c0_19, %c0_20] : memref<1x16x128xf32, #tpu.memory_space<vmem>>, vector<1x16x128xf32>
    %16 = vector.shape_cast %15 : vector<1x16x128xf32> to vector<16x128xf32>
    %17 = vector.shape_cast %14 : vector<16x128xf32> to vector<1x16x128xf32>
    tpu.vector_store %arg6[%c0_18, %c0_19, %c0_20], %17 {strides = array<i32>} : memref<1x16x128xf32, #tpu.memory_space<vmem>>, vector<1x16x128xf32>,
    return
  }
  func.func @transform_0(%arg0: i32, %arg1: i32) -> (i32, i32, i32) {
    %c0_i32 = arith.constant 0 : i32
    %c0_i32_0 = arith.constant 0 : i32
    return %arg0, %c0_i32, %arg1 : i32, i32, i32
  }
  func.func @transform_1(%arg0: i32, %arg1: i32) -> (i32, i32, i32, i32) {
    %c0_i32 = arith.constant 0 : i32
    %c0_i32_0 = arith.constant 0 : i32
    %c0_i32_1 = arith.constant 0 : i32
    return %arg0, %arg1, %c0_i32, %c0_i32_0 : i32, i32, i32, i32
  }
  func.func @transform_2(%arg0: i32, %arg1: i32) -> (i32, i32) {
    %c0_i32 = arith.constant 0 : i32
    %c0_i32_0 = arith.constant 0 : i32
    %c0_i32_1 = arith.constant 0 : i32
    return %c0_i32, %c0_i32_0 : i32, i32
  }
  func.func @transform_3(%arg0: i32, %arg1: i32) -> (i32, i32) {
    %c0_i32 = arith.constant 0 : i32
    %c0_i32_0 = arith.constant 0 : i32
    %c0_i32_1 = arith.constant 0 : i32
    return %c0_i32, %c0_i32_0 : i32, i32
  }
  func.func @transform_4(%arg0: i32, %arg1: i32) -> (i32, i32, i32) {
    %c0_i32 = arith.constant 0 : i32
    %c0_i32_0 = arith.constant 0 : i32
    return %arg0, %c0_i32, %arg1 : i32, i32, i32
  }
}

</mosaic_0001>

<llo_original>
// kernel: tile.0
$region0: #{tile.0}
  %s0 = inlined_call_operand.vmem [shape: f32[4,4], index: 0, kind: input, shape index: {}]
  %s1 = inlined_call_operand.vmem [shape: f32[16,1], index: 1, kind: output, shape index: {}]
  $region1: #{tile.0} parent=0
    #allocation0 [shape = 'u8[4096]{0}', space=vmem, size = 0x1000, scoped, tag = 'scoped mem for input reshape']
    %s3 = ssub.s32 16, 1
    %v4 = vld [vmem:[%s0] sm:%s3]
    %5 = vst [vmem:[#allocation0] sm:%s3] %v4
    %v6 = vld [vmem:[#allocation0] sm:$0xf]
    %vm7 = vcmask 7168
    %8 = vst.msk [vmem:[%s1] ss:$4 sm:$0xf] %vm7, %v6
    %v9 = vld [vmem:[#allocation0] sm:$0xf]
    %10 = vrot.lane.b32.xlu0 %v9, 127
    %v11 = vpop.permute.xlu0 %10
    %vm12 = vcmask 7168
    %s13 = scalar_lea.vmem %s1, 1
    %14 = vst.msk [vmem:[%s13] ss:$4 sm:$0xf] %vm12, %v11
    %v15 = vld [vmem:[#allocation0] sm:$0xf]
    %16 = vrot.lane.b32.xlu0 %v15, 126
    %v17 = vpop.permute.xlu0 %16
    %vm18 = vcmask 7168
    %s19 = scalar_lea.vmem %s1, 2
    %20 = vst.msk [vmem:[%s19] ss:$4 sm:$0xf] %vm18, %v17
    %v21 = vld [vmem:[#allocation0] sm:$0xf]
    %22 = vrot.lane.b32.xlu0 %v21, 125
    %v23 = vpop.permute.xlu0 %22
    %vm24 = vcmask 7168
    %s25 = scalar_lea.vmem %s1, 3
    %26 = vst.msk [vmem:[%s25] ss:$4 sm:$0xf] %vm24, %v23

// kernel: tile.8
$region0: #{tile.8}
  #allocation0 [shape = 's32[1]{0}', space=sflag, size = 0x4, scoped, tag = 'scoped memory for tile.8']
  %s0 = inlined_call_operand.vmem [shape: f32[4], index: 0, kind: input, shape index: {}]
  %s1 = inlined_call_operand.vmem [shape: f32[4,4], index: 1, kind: output, shape index: {}]
  // Predicated region
  $region2: #{tile.8} parent=0 // pred_check
    _
  $region3: #{tile.8} parent=0 // pred_check_branch
    %3 = sbr.rel (0) target = $region5
  $region4: #{tile.8} parent=0 // pred_region
    _
  $region5: #{tile.8} parent=0 // pred_fallthru
    _
  %v4 = vld [vmem:[%s0] ss:$0 sm:$0xff]
  %5 = vst [vmem:[%s1] sm:$0xf] %v4

// kernel: causal_conv_transpose1d.1
$region0: #{causal_conv_transpose1d.1}
  #allocation0 [shape = 'u32[]', space=smem, size = 0x4, offset = 0x4, fixed_abs, tag = 'smem constant byte address 0x4 - core index']
  #allocation1 [shape = 'u32[72,128]{1,0:T(1,128)}', space=vmem, size = 0x9000, scoped, tag = 'internal scratch']
  #allocation2 [shape = 'f32[16,128]{1,0:T(8,128)}', space=vmem, size = 0x2000, scoped, tag = 'scratch operand']
  %s0 = inlined_call_operand.vmem [shape: f32[2,8,128], index: 0, kind: input, shape index: {}]
  %s1 = inlined_call_operand.vmem [shape: f32[2,1,8,128], index: 1, kind: input, shape index: {}]
  %s2 = inlined_call_operand.vmem [shape: f32[16,16], index: 2, kind: input, shape index: {}]
  %s3 = inlined_call_operand.vmem [shape: f32[16,1], index: 3, kind: input, shape index: {}]
  %s4 = inlined_call_operand.vmem [shape: f32[2,16,128], index: 4, kind: output, shape index: {}]
  %s5 = sld [smem:[#allocation0]]
  $region49: #{causal_conv_transpose1d.1} parent=0
    _
  %s7 = ssub.s32 1, %s5
  %s8 = scalar_select 0, %s7, %s5
  loop: start=0, step=1, limit=4
  $region2: #{causal_conv_transpose1d.1} parent=0 // loop_pre_header
    _
  $region3: #{causal_conv_transpose1d.1} parent=0 // loop_header
    %s10 = sphi 0, %s14
    %p11 = scmp.ge.s32.totalorder %s10, 4
    %s17 = sphi 0, %s29
    %s18 = sphi 0, %s25
    %s19 = sphi 0, %s17
    %s20 = sphi 0, %s18
    %s21 = sphi 0, %s19
    %s22 = sphi 0, %s20
    %s34 = sphi 0, %s36
    %s37 = sphi 0, %s34
    %s38 = sphi 0, %s37
    %s54 = sphi 0, %s38
    %s62 = sphi 0, %s64
    %s65 = sphi 0, %s62
    %s66 = sphi 0, %s65
    %s82 = sphi 0, %s66
    %s86 = sphi 0, %s86
    %s88 = sphi 0, %s86
    %s89 = sphi 0, %s88
    %s103 = sphi 0, %s89
    %s107 = sphi 0, %s107
    %s109 = sphi 0, %s107
    %s110 = sphi 0, %s109
    %s124 = sphi 0, %s110
    %s132 = sphi 0, %s134
    %s135 = sphi 0, %s132
    %s136 = sphi 0, %s135
    %s152 = sphi 0, %s136
  $region4: #{causal_conv_transpose1d.1} parent=0 // loop_header_branch
    %13 = sbr.rel (%p11) target = $region8
  $region5: #{causal_conv_transpose1d.1} parent=0 // loop_body
    %s15 = ssub.s32 %s10, 1
    %s16 = ssub.s32 %s10, 2
    %s23 = sadd.s32 1, %s18
    %p24 = scmp.ge.s32.totalorder %s23, 1
    %s25 = scalar_select %p24, 0, %s23
    %s26 = sadd.s32 1, %s17
    %s27 = scalar_select %p24, %s26, %s17
    %p28 = scmp.ge.s32.totalorder %s27, 2
    %s29 = scalar_select %p28, 0, %s27
    %s30 = ssub.s32 %s17, %s29
    %s31 = ssub.s32 %s18, %s25
    %s32 = sor.u32 %s30, %s31
    %p33 = scmp.eq.s32.totalorder %s32, 0
    %s35 = sadd.s32 %s34, 1
    %s36 = scalar_select %p33, %s34, %s35
    %p39 = pneg %p33
    %p40 = scmp.eq.s32.totalorder %s10, 1
    %p41 = por %p39, %p40
    %p42 = scmp.ne.s32.totalorder %s34, %s37
    %p43 = scmp.eq.s32.totalorder %s10, 0
    %p44 = por %p42, %p43
    %p45 = scmp.ne.s32.totalorder %s34, %s37
    %p46 = scmp.eq.s32.totalorder %s15, 1
    %p47 = por %p45, %p46
    %p48 = scmp.ne.s32.totalorder %s37, %s38
    %p49 = scmp.eq.s32.totalorder %s15, 0
    %p50 = por %p48, %p49
    %p51 = scmp.ne.s32.totalorder %s37, %s38
    %p52 = scmp.eq.s32.totalorder %s16, 1
    %p53 = por %p51, %p52
    %p55 = scmp.ne.s32.totalorder %s38, %s54
    %p56 = scmp.eq.s32.totalorder %s16, 0
    %p57 = por %p55, %p56
    %s58 = ssub.s32 %s17, %s29
    %s59 = ssub.s32 %s18, %s25
    %s60 = sor.u32 %s58, %s59
    %p61 = scmp.eq.s32.totalorder %s60, 0
    %s63 = sadd.s32 %s62, 1
    %s64 = scalar_select %p61, %s62, %s63
    %p67 = pneg %p61
    %p68 = scmp.eq.s32.totalorder %s10, 1
    %p69 = por %p67, %p68
    %p70 = scmp.ne.s32.totalorder %s62, %s65
    %p71 = scmp.eq.s32.totalorder %s10, 0
    %p72 = por %p70, %p71
    %p73 = scmp.ne.s32.totalorder %s62, %s65
    %p74 = scmp.eq.s32.totalorder %s15, 1
    %p75 = por %p73, %p74
    %p76 = scmp.ne.s32.totalorder %s65, %s66
    %p77 = scmp.eq.s32.totalorder %s15, 0
    %p78 = por %p76, %p77
    %p79 = scmp.ne.s32.totalorder %s65, %s66
    %p80 = scmp.eq.s32.totalorder %s16, 1
    %p81 = por %p79, %p80
    %p83 = scmp.ne.s32.totalorder %s66, %s82
    %p84 = scmp.eq.s32.totalorder %s16, 0
    %p85 = por %p83, %p84
    %s87 = sadd.s32 %s86, 1
    %p90 = scmp.eq.s32.totalorder %s10, 1
    %p91 = scmp.ne.s32.totalorder %s86, %s88
    %p92 = scmp.eq.s32.totalorder %s10, 0
    %p93 = por %p91, %p92
    %p94 = scmp.ne.s32.totalorder %s86, %s88
    %p95 = scmp.eq.s32.totalorder %s15, 1
    %p96 = por %p94, %p95
    %p97 = scmp.ne.s32.totalorder %s88, %s89
    %p98 = scmp.eq.s32.totalorder %s15, 0
    %p99 = por %p97, %p98
    %p100 = scmp.ne.s32.totalorder %s88, %s89
    %p101 = scmp.eq.s32.totalorder %s16, 1
    %p102 = por %p100, %p101
    %p104 = scmp.ne.s32.totalorder %s89, %s103
    %p105 = scmp.eq.s32.totalorder %s16, 0
    %p106 = por %p104, %p105
    %s108 = sadd.s32 %s107, 1
    %p111 = scmp.eq.s32.totalorder %s10, 1
    %p112 = scmp.ne.s32.totalorder %s107, %s109
    %p113 = scmp.eq.s32.totalorder %s10, 0
    %p114 = por %p112, %p113
    %p115 = scmp.ne.s32.totalorder %s107, %s109
    %p116 = scmp.eq.s32.totalorder %s15, 1
    %p117 = por %p115, %p116
    %p118 = scmp.ne.s32.totalorder %s109, %s110
    %p119 = scmp.eq.s32.totalorder %s15, 0
    %p120 = por %p118, %p119
    %p121 = scmp.ne.s32.totalorder %s109, %s110
    %p122 = scmp.eq.s32.totalorder %s16, 1
    %p123 = por %p121, %p122
    %p125 = scmp.ne.s32.totalorder %s110, %s124
    %p126 = scmp.eq.s32.totalorder %s16, 0
    %p127 = por %p125, %p126
    %s128 = ssub.s32 %s17, %s29
    %s129 = ssub.s32 %s18, %s25
    %s130 = sor.u32 %s128, %s129
    %p131 = scmp.eq.s32.totalorder %s130, 0
    %s133 = sadd.s32 %s132, 1
    %s134 = scalar_select %p131, %s132, %s133
    %p137 = pneg %p131
    %p138 = scmp.eq.s32.totalorder %s10, 1
    %p139 = por %p137, %p138
    %p140 = scmp.ne.s32.totalorder %s132, %s135
    %p141 = scmp.eq.s32.totalorder %s10, 0
    %p142 = por %p140, %p141
    %p143 = scmp.ne.s32.totalorder %s132, %s135
    %p144 = scmp.eq.s32.totalorder %s15, 1
    %p145 = por %p143, %p144
    %p146 = scmp.ne.s32.totalorder %s135, %s136
    %p147 = scmp.eq.s32.totalorder %s15, 0
    %p148 = por %p146, %p147
    %p149 = scmp.ne.s32.totalorder %s135, %s136
    %p150 = scmp.eq.s32.totalorder %s16, 1
    %p151 = por %p149, %p150
    %p153 = scmp.ne.s32.totalorder %s136, %s152
    %p154 = scmp.eq.s32.totalorder %s16, 0
    %p155 = por %p153, %p154
    %p156 = scmp.le.s32.totalorder 1, %s10
    %p157 = scmp.lt.s32.totalorder %s10, 3
    %p158 = pnand %p156, %p157
    %p159 = pneg %p158
    // Predicated region
    $region9: #{causal_conv_transpose1d.1} parent=5 // pred_check
      _
    $region10: #{causal_conv_transpose1d.1} parent=5 // pred_check_branch
      %161 = sbr.rel (%p158) target = $region12
    $region11: #{causal_conv_transpose1d.1} parent=5 // pred_region
      %s162 = ssub.s32 %s10, 1
      // Predicated region
      $region13: #{causal_conv_transpose1d.1} parent=11 // pred_check
        %p163 = pneg %p99
      $region14: #{causal_conv_transpose1d.1} parent=11 // pred_check_branch
        %165 = sbr.rel (%p163) target = $region16
      $region15: #{causal_conv_transpose1d.1} parent=11 // pred_region
        _
      $region16: #{causal_conv_transpose1d.1} parent=11 // pred_fallthru
        _
      // Predicated region
      $region17: #{causal_conv_transpose1d.1} parent=11 // pred_check
        %p166 = pneg %p120
      $region18: #{causal_conv_transpose1d.1} parent=11 // pred_check_branch
        %168 = sbr.rel (%p166) target = $region20
      $region19: #{causal_conv_transpose1d.1} parent=11 // pred_region
        _
      $region20: #{causal_conv_transpose1d.1} parent=11 // pred_fallthru
        _
    $region12: #{causal_conv_transpose1d.1} parent=5 // pred_fallthru
      _
    %p169 = scmp.lt.s32.totalorder %s10, 2
    // Predicated region
    $region21: #{causal_conv_transpose1d.1} parent=5 // pred_check
      %p170 = pneg %p169
    $region22: #{causal_conv_transpose1d.1} parent=5 // pred_check_branch
      %172 = sbr.rel (%p170) target = $region24
    $region23: #{causal_conv_transpose1d.1} parent=5 // pred_region
      // Predicated region
      $region25: #{causal_conv_transpose1d.1} parent=23 // pred_check
        %p173 = pneg %p44
      $region26: #{causal_conv_transpose1d.1} parent=23 // pred_check_branch
        %175 = sbr.rel (%p173) target = $region28
      $region27: #{causal_conv_transpose1d.1} parent=23 // pred_region
        %p176 = scmp.lt.s32.totalorder %s17, 1
        %s177 = scalar_select %p176, %s17, 1
        %p178 = scmp.lt.s32.totalorder %s18, 0
        %s179 = scalar_select %p178, %s18, 0
        %s180 = sadd.s32 %s179, %s177
        %s181 = smul.addr %s180, 8
        %s182 = scalar_lea.vmem %s0, %s181
      $region28: #{causal_conv_transpose1d.1} parent=23 // pred_fallthru
        _
      // Predicated region
      $region29: #{causal_conv_transpose1d.1} parent=23 // pred_check
        %p183 = pneg %p72
      $region30: #{causal_conv_transpose1d.1} parent=23 // pred_check_branch
        %185 = sbr.rel (%p183) target = $region32
      $region31: #{causal_conv_transpose1d.1} parent=23 // pred_region
        %p186 = scmp.lt.s32.totalorder %s17, 1
        %s187 = scalar_select %p186, %s17, 1
        %p188 = scmp.lt.s32.totalorder %s18, 0
        %s189 = scalar_select %p188, %s18, 0
        %s190 = sadd.s32 %s189, %s187
        %s191 = smul.addr %s190, 8
        %s192 = scalar_lea.vmem %s1, %s191
      $region32: #{causal_conv_transpose1d.1} parent=23 // pred_fallthru
        _
    $region24: #{causal_conv_transpose1d.1} parent=5 // pred_fallthru
      _
    %p193 = scmp.le.s32.totalorder 1, %s10
    %p194 = scmp.lt.s32.totalorder %s10, 3
    %p195 = pnand %p193, %p194
    %p196 = pneg %p195
    // Predicated region
    $region33: #{causal_conv_transpose1d.1} parent=5 // pred_check
      _
    $region34: #{causal_conv_transpose1d.1} parent=5 // pred_check_branch
      %198 = sbr.rel (%p195) target = $region36
    $region35: #{causal_conv_transpose1d.1} parent=5 // pred_region
      %s199 = ssub.s32 %s10, 1
      %p200 = scmp.lt.s32.totalorder %s19, 1
      %s201 = scalar_select %p200, %s19, 1
      %p202 = scmp.lt.s32.totalorder %s20, 0
      %s203 = scalar_select %p202, %s20, 0
      %s204 = sadd.s32 %s203, %s201
      %s205 = smul.addr %s204, 8
      %s206 = scalar_lea.vmem %s0, %s205
      %p207 = pneg %p50
      %p208 = pneg %p47
      %p209 = scmp.lt.s32.totalorder %s19, 1
      %s210 = scalar_select %p209, %s19, 1
      %p211 = scmp.lt.s32.totalorder %s20, 0
      %s212 = scalar_select %p211, %s20, 0
      %s213 = sadd.s32 %s212, %s210
      %s214 = smul.addr %s213, 8
      %s215 = scalar_lea.vmem %s1, %s214
      %p216 = pneg %p78
      %p217 = pneg %p75
      %p218 = pneg %p99
      %p219 = pneg %p96
      %p220 = pneg %p120
      %p221 = pneg %p117
      %p222 = pneg %p148
      %p223 = pneg %p145
      %p224 = scmp.lt.s32.totalorder %s19, 1
      %s225 = scalar_select %p224, %s19, 1
      %p226 = scmp.lt.s32.totalorder %s20, 0
      %s227 = scalar_select %p226, %s20, 0
      %s228 = smul.addr %s225, 2
      %s229 = sadd.s32 %s227, %s228
      %s230 = smul.addr %s229, 8
      %s231 = scalar_lea.vmem %s4, %s230
      %p232 = scmp.lt.s32.totalorder %s19, 1
      %s233 = scalar_select %p232, %s19, 1
      %p234 = scmp.lt.s32.totalorder %s20, 0
      %s235 = scalar_select %p234, %s20, 0
      %s236 = sadd.s32 %s235, %s233
      %s237 = smul.addr %s236, 8
      %s238 = scalar_lea.vmem %s0, %s237
      %p239 = scmp.lt.s32.totalorder %s19, 1
      %s240 = scalar_select %p239, %s19, 1
      %p241 = scmp.lt.s32.totalorder %s20, 0
      %s242 = scalar_select %p241, %s20, 0
      %s243 = sadd.s32 %s242, %s240
      %s244 = smul.addr %s243, 8
      %s245 = scalar_lea.vmem %s1, %s244
      %p246 = scmp.lt.s32.totalorder %s19, 1
      %s247 = scalar_select %p246, %s19, 1
      %p248 = scmp.lt.s32.totalorder %s20, 0
      %s249 = scalar_select %p248, %s20, 0
      %s250 = smul.addr %s247, 2
      %s251 = sadd.s32 %s249, %s250
      %s252 = smul.addr %s251, 8
      %s253 = scalar_lea.vmem %s4, %s252
      %v254 = vld [vmem:[%s238] sm:$0xff]
      %255 = vst [vmem:[#allocation2] sm:$0xff] %v254
      %v256 = vld [vmem:[%s245] sm:$0xff]
      %258 = vrot.lane.b32.xlu0 %v256, 1
      %v259 = vpop.permute.xlu0 %258
      %vm261 = vcmask 7168
      %262 = vst.msk [vmem:[#allocation2 + $0x8] sm:$0xff] %vm261, %v259
      %v263 = vld [vmem:[%s238] sm:$0xff]
      %265 = vrot.lane.b32.xlu0 %v263, 1
      %v266 = vpop.permute.xlu0 %265
      %vm268 = vcmask 1047560
      %269 = vst.msk [vmem:[#allocation2 + $0x8] sm:$0xff] %vm268, %v266
      %v270 = vld [vmem:[%s2] sm:$0xff]
      %v271 = vld [vmem:[%s2 + $0x8] sm:$0xff]
      %v272 = vld [vmem:[#allocation2] sm:$0xff]
      %v273 = vld [vmem:[#allocation2 + $0x8] sm:$0xff]
      %v274 = vld [vmem:[%s3] sm:$0xff]
      %v275 = vld [vmem:[%s3 + $0x8] sm:$0xff]
      %277 = vset.pattern.permute.xlu0 0
      %278 = vperm.xlu0 %277, %v274
      %v279 = vpop.permute.xlu0 %278
      %282 = vset.pattern.permute.xlu0 0
      %283 = vperm.xlu0 %282, %v275
      %v284 = vpop.permute.xlu0 %283
      %vm286 = vcmask 130048
      %v288 = vsel %vm286, %v270, 0
      %v291 = vsel %vm286, %v271, 0
      %293 = vmatpush.msra.mxu0 0.0
      %294 = vmatpush.msra.mxu0 0.0
      %295 = vmatpush.msra.mxu0 0.0
      %296 = vmatpush.msra.mxu0 0.0
      %297 = vmatpush.msra.mxu0 0.0
      %298 = vmatpush.msra.mxu0 0.0
      %299 = vmatpush.msra.mxu0 0.0
      %300 = vmatpush.msra.mxu0 0.0
      %301 = vmatpush.msra.mxu0 0.0
      %302 = vmatpush.msra.mxu0 0.0
      %303 = vmatpush.msra.mxu0 0.0
      %304 = vmatpush.msra.mxu0 0.0
      %305 = vmatpush.msra.mxu0 0.0
      %306 = vmatpush.msra.mxu0 0.0
      %307 = vmatpush.msra.mxu0 %v273
      %308 = vmatpush.msra.mxu0 %v272
      %309 = vmatmul.f32.gmra.mxu0 %v288
      %v310 = vpop.f32.mrf.mxu0
      %v311 = vadd.f32 %v279, %v310
      %312 = vmatmul.f32.gmra.mxu0 %v291
      %v313 = vpop.f32.mrf.mxu0
      %v314 = vadd.f32 %v284, %v313
      %315 = vdwg.mxu0
      %316 = vst [vmem:[%s253] sm:$0xff] %v311
      %317 = vst [vmem:[%s253 + $0x8] sm:$0xff] %v314
      %p318 = scmp.lt.s32.totalorder %s19, 1
      %s319 = scalar_select %p318, %s19, 1
      %p320 = scmp.lt.s32.totalorder %s20, 0
      %s321 = scalar_select %p320, %s20, 0
      %s322 = smul.addr %s319, 2
      %s323 = sadd.s32 %s321, %s322
      %s324 = smul.addr %s323, 8
      %s325 = scalar_lea.vmem %s4, %s324
      // Predicated region
      $region37: #{causal_conv_transpose1d.1} parent=35 // pred_check
        %p326 = pneg %p145
      $region38: #{causal_conv_transpose1d.1} parent=35 // pred_check_branch
        %328 = sbr.rel (%p326) target = $region40
      $region39: #{causal_conv_transpose1d.1} parent=35 // pred_region
        _
      $region40: #{causal_conv_transpose1d.1} parent=35 // pred_fallthru
        _
    $region36: #{causal_conv_transpose1d.1} parent=5 // pred_fallthru
      _
    %p329 = scmp.le.s32.totalorder 2, %s10
    // Predicated region
    $region41: #{causal_conv_transpose1d.1} parent=5 // pred_check
      %p330 = pneg %p329
    $region42: #{causal_conv_transpose1d.1} parent=5 // pred_check_branch
      %332 = sbr.rel (%p330) target = $region44
    $region43: #{causal_conv_transpose1d.1} parent=5 // pred_region
      %s333 = ssub.s32 %s10, 2
      // Predicated region
      $region45: #{causal_conv_transpose1d.1} parent=43 // pred_check
        %p334 = pneg %p151
      $region46: #{causal_conv_transpose1d.1} parent=43 // pred_check_branch
        %336 = sbr.rel (%p334) target = $region48
      $region47: #{causal_conv_transpose1d.1} parent=43 // pred_region
        %p337 = scmp.lt.s32.totalorder %s21, 1
        %s338 = scalar_select %p337, %s21, 1
        %p339 = scmp.lt.s32.totalorder %s22, 0
        %s340 = scalar_select %p339, %s22, 0
        %s341 = smul.addr %s338, 2
        %s342 = sadd.s32 %s340, %s341
        %s343 = smul.addr %s342, 8
        %s344 = scalar_lea.vmem %s4, %s343
      $region48: #{causal_conv_transpose1d.1} parent=43 // pred_fallthru
        _
    $region44: #{causal_conv_transpose1d.1} parent=5 // pred_fallthru
      _
  $region6: #{causal_conv_transpose1d.1} parent=0 // loop_footer
    %s14 = sadd.s32 1, %s10
  $region7: #{causal_conv_transpose1d.1} parent=0 // loop_footer_branch
    %9 = sbr.rel target = $region3
  $region8: #{causal_conv_transpose1d.1} parent=0 // loop_exit
    _

</llo_original>
